<compile_context>
chip_gen: v6e
topology: v6e:2x2x1
jax: 0.10.0
libtpu: 0.0.40
codegen_flags: <defaults>
</compile_context>

<pallas_src>
import functools

import jax
import jax.numpy as jnp
from jax.experimental import pallas as pl
from jax.experimental.pallas import tpu as pltpu

L2_REG_COEFF = 0.0001                 # unused in forward (matches torch module)
EPS = 2.718281828459045 ** (-70)      # ~3.98e-31, normal f32 -> log(0 + EPS) is finite

SUBLANES = 8


def _cdiv(a, b):
    return -(-a // b)


def _default_num_cores():
    """2 TensorCores per chip only on v7x; v5e/v6e have 1 (grid axis would be a serial loop)."""
    try:
        kind = jax.devices()[0].device_kind.lower()
    except Exception:
        return 1
    return 2 if ("v7" in kind or "7x" in kind) else 1


def _policy_ce_kernel(pi_ref, p_ref, out_ref, acc_ref, *,
                      tb, batch, steps, need_mask):
    """Accumulates sum_{rows,lanes} pi * log(p + EPS) over this core's blocks."""
    c = pl.program_id(0)        # "parallel" axis (megacore split on v7x)
    i = pl.program_id(1)        # "arbitrary" reduction axis over batch blocks

    @pl.when(i == 0)
    def _init():
        acc_ref[...] = jnp.zeros_like(acc_ref)

    pi = pi_ref[...].astype(jnp.float32)
    p = p_ref[...].astype(jnp.float32)

    if need_mask:
        # Logical (unclamped) block index: rows >= batch are the ragged tail or
        # surplus grid points (which re-read the last block) -> contribute 0.
        bi = c * steps + i
        rows = bi * tb + jax.lax.broadcasted_iota(jnp.int32, pi.shape, 0)
        valid = rows < batch
        pi = jnp.where(valid, pi, 0.0)
        p = jnp.where(valid, p, 1.0)   # log(1 + EPS) ~ 0 and pi is 0 anyway

    # Elementwise accumulate (VALU add + EUP log only); sublane reduce is
    # deferred to the finalize step, outside the hot loop.
    acc_ref[...] += pi * jnp.log(p + EPS)

    @pl.when(i == pl.num_programs(1) - 1)
    def _finalize():
        out_ref[...] = jnp.sum(acc_ref[...], axis=0, keepdims=True)[None]


def alphazero_loss(z, v, pi, p, named_parameters=None, *,
                   block_rows=None, num_cores=None,
                   tiny_fallback_elems=16384,
                   vmem_limit_bytes=32 * 1024 * 1024):
    """Forward of AlphaZeroLoss: mean_b[ (z-v)^2 - sum_a pi * log(p + eps) ].

    z, v: (B,) or (B, 1). pi, p: (B, A), f32 or bf16 (upcast in-kernel).
    named_parameters is accepted for API parity but unused.
    """
    # TODO(synk): l2_reg_coeff / named_parameters are not used by the torch
    # forward (no L2 term there), so none is added here either.
    del named_parameters
    pi = jnp.asarray(pi)
    p = jnp.asarray(p)
    B, A = pi.shape

    z_flat = jnp.asarray(z, jnp.float32).reshape(-1)
    v_flat = jnp.asarray(v, jnp.float32).reshape(-1)
    # O(B) value term stays in plain XLA: negligible traffic, keeps the Pallas
    # kernel a pure two-stream policy reduction and avoids core imbalance.
    value_mean = jnp.mean((z_flat - v_flat) ** 2)

    # Tiny problems: per-grid-step / launch overhead dominates, let XLA fuse.
    if B * A < tiny_fallback_elems:
        policy_sum = jnp.sum(pi.astype(jnp.float32)
                             * jnp.log(p.astype(jnp.float32) + EPS))
        return value_mean - policy_sum / B

    if num_cores is None:
        num_cores = _default_num_cores()

    # Block sizing: (2 inputs x 2 pipeline buffers) x block + f32 accumulator
    # scratch, budgeted to ~6 MiB -> far under the 32 MiB scoped VMEM limit
    # (and comfortably within v7x's 64 MiB physical VMEM).
    itemsize = max(pi.dtype.itemsize, p.dtype.itemsize)
    budget_elems = (6 * 1024 * 1024) // (4 * itemsize + 4)
    tb_cap = max(SUBLANES, (budget_elems // A) // SUBLANES * SUBLANES)
    if block_rows is not None:
        tb_cap = max(SUBLANES, (block_rows // SUBLANES) * SUBLANES)

    if B <= tb_cap:
        tb, steps_total = B, 1          # full-dim block (always legal)
    else:
        tb = tb_cap                     # multiple of 8 sublanes
        steps_total = _cdiv(B, tb)

    num_cores_eff = max(1, min(num_cores, steps_total))
    steps = _cdiv(steps_total, num_cores_eff)
    # True if the last block is ragged or some (core, step) points are surplus.
    need_mask = (num_cores_eff * steps * tb) != B
    last_block = steps_total - 1

    def block_index_map(c, i):
        bi = c * steps + i
        if need_mask:
            # Surplus grid points re-read the last block; their contribution is
            # zeroed in-kernel using the unclamped logical index.
            bi = jnp.minimum(bi, last_block)
        return (bi, 0)

    kernel = functools.partial(_policy_ce_kernel, tb=tb, batch=B,
                               steps=steps, need_mask=need_mask)

    partials = pl.pallas_call(
        kernel,
        out_shape=jax.ShapeDtypeStruct((num_cores_eff, 1, A), jnp.float32),
        grid_spec=pltpu.PrefetchScalarGridSpec(
            num_scalar_prefetch=0,
            grid=(num_cores_eff, steps),
            in_specs=[
                pl.BlockSpec((tb, A), block_index_map),
                pl.BlockSpec((tb, A), block_index_map),
            ],
            out_specs=pl.BlockSpec((1, 1, A), lambda c, i: (c, 0, 0)),
            scratch_shapes=[pltpu.VMEM((tb, A), jnp.float32)],
        ),
        compiler_params=pltpu.CompilerParams(
            dimension_semantics=("parallel", "arbitrary"),
            vmem_limit_bytes=vmem_limit_bytes,
        ),
    )(pi, p)

    # Cheap finish: combine per-core / per-lane partials; fold in 1/B once.
    policy_sum = jnp.sum(partials)
    return value_mean - policy_sum / B


def alphazero_loss_ref(z, v, pi, p):
    z = jnp.asarray(z, jnp.float32).reshape(-1)
    v = jnp.asarray(v, jnp.float32).reshape(-1)
    pi = jnp.asarray(pi, jnp.float32)
    p = jnp.asarray(p, jnp.float32)
    per_example = (z - v) ** 2 - jnp.sum(pi * jnp.log(p + EPS), axis=1)
    return jnp.mean(per_example)


if __name__ == "__main__":
    key = jax.random.PRNGKey(0)

    def make_inputs(k, B, A, dtype=jnp.float32):
        kz, kv, kpi, kp = jax.random.split(k, 4)
        z = jax.random.uniform(kz, (B,), jnp.float32, minval=-1.0, maxval=1.0)
        v = jax.random.uniform(kv, (B,), jnp.float32, minval=-1.0, maxval=1.0)
        pi = jax.nn.softmax(jax.random.normal(kpi, (B, A), jnp.float32), -1).astype(dtype)
        p = jax.nn.softmax(jax.random.normal(kp, (B, A), jnp.float32), -1).astype(dtype)
        return z, v, pi, p

    k1, k2, k3, k4 = jax.random.split(key, 4)

    # Case 1: small shape, single block, force the Pallas path.
    z, v, pi, p = make_inputs(k1, 32, 64)
    got = jax.block_until_ready(alphazero_loss(z, v, pi, p, tiny_fallback_elems=0))
    want = jax.block_until_ready(alphazero_loss_ref(z, v, pi, p))
    assert jnp.allclose(got, want, rtol=1e-5, atol=1e-5), (got, want)

    # Case 2: ragged batch (250 % 64 != 0), explicit 2-core grid axis,
    # multi-step reduction -> exercises in-kernel masking, clamped index_map,
    # and the resident accumulator / finalize path.
    z, v, pi, p = make_inputs(k2, 250, 96)
    got = jax.block_until_ready(alphazero_loss(
        z, v, pi, p, block_rows=64, num_cores=2, tiny_fallback_elems=0))
    want = jax.block_until_ready(alphazero_loss_ref(z, v, pi, p))
    assert jnp.allclose(got, want, rtol=1e-4, atol=1e-4), (got, want)

    # Case 3: bf16 policy tensors kept bf16 in HBM, upcast in-kernel (no mask).
    z, v, pi, p = make_inputs(k3, 512, 128, dtype=jnp.bfloat16)
    got = jax.block_until_ready(alphazero_loss(
        z, v, pi, p, block_rows=128, num_cores=2, tiny_fallback_elems=0))
    want = jax.block_until_ready(alphazero_loss_ref(z, v, pi, p))
    assert jnp.allclose(got, want, rtol=1e-4, atol=1e-4), (got, want)

    # Case 4: tiny-problem fallback path (plain jnp, no pallas_call).
    z, v, pi, p = make_inputs(k4, 8, 16)
    got = jax.block_until_ready(alphazero_loss(z, v, pi, p))
    want = jax.block_until_ready(alphazero_loss_ref(z, v, pi, p))
    assert jnp.allclose(got, want, rtol=1e-5, atol=1e-5), (got, want)

    print("KERNEL_OK")
</pallas_src>

<mosaic_0001>
module attributes {stable_mosaic.version = 11 : i64} {
  func.func @_policy_ce_kernel(%arg0: i32, %arg1: i32, %arg2: memref<32x64xf32, #tpu.memory_space<vmem>>, %arg3: memref<32x64xf32, #tpu.memory_space<vmem>>, %arg4: memref<1x1x64xf32, #tpu.memory_space<vmem>>, %arg5: memref<32x64xf32, #tpu.memory_space<vmem>>) attributes {dimension_semantics = [#tpu.dimension_semantics<parallel>, #tpu.dimension_semantics<arbitrary>], iteration_bounds = array<i64: 1, 1>, scalar_prefetch = 0 : i64, scratch_operands = 1 : i64, tpu.core_type = #tpu.core_type<tc>, window_params = [{transform_indices = @transform_0, window_bounds = array<i64: 32, 64>}, {transform_indices = @transform_1, window_bounds = array<i64: 32, 64>}, {transform_indices = @transform_2, window_bounds = array<i64: 1, 1, 64>}]} {
    %c0_i32 = arith.constant 0 : i32
    %0 = arith.cmpi eq, %arg1, %c0_i32 : i32
    %1 = arith.extui %0 : i1 to i32
    %c0_i32_0 = arith.constant 0 : i32
    %2 = arith.cmpi ne, %1, %c0_i32_0 : i32
    scf.if %2 {
      %cst_10 = arith.constant 0.000000e+00 : f32
      %15 = vector.broadcast %cst_10 : f32 to vector<32x64xf32>
      %c0_11 = arith.constant 0 : index
      %c0_12 = arith.constant 0 : index
      %16 = vector.load %arg5[%c0_11, %c0_12] : memref<32x64xf32, #tpu.memory_space<vmem>>, vector<32x64xf32>
      tpu.vector_store %arg5[%c0_11, %c0_12], %15 {strides = array<i32>} : memref<32x64xf32, #tpu.memory_space<vmem>>, vector<32x64xf32>,
    } else {
    }
    %c0 = arith.constant 0 : index
    %c0_1 = arith.constant 0 : index
    %3 = vector.load %arg2[%c0, %c0_1] : memref<32x64xf32, #tpu.memory_space<vmem>>, vector<32x64xf32>
    %c0_2 = arith.constant 0 : index
    %c0_3 = arith.constant 0 : index
    %4 = vector.load %arg3[%c0_2, %c0_3] : memref<32x64xf32, #tpu.memory_space<vmem>>, vector<32x64xf32>
    %c0_4 = arith.constant 0 : index
    %c0_5 = arith.constant 0 : index
    %5 = vector.load %arg5[%c0_4, %c0_5] : memref<32x64xf32, #tpu.memory_space<vmem>>, vector<32x64xf32>
    %cst = arith.constant 3.975450e-31 : f32
    %6 = vector.broadcast %cst : f32 to vector<32x64xf32>
    %7 = arith.addf %4, %6 : vector<32x64xf32>
    %8 = math.log %7 : vector<32x64xf32>
    %9 = arith.mulf %3, %8 : vector<32x64xf32>
    %10 = arith.addf %5, %9 : vector<32x64xf32>
    %c0_6 = arith.constant 0 : index
    %c0_7 = arith.constant 0 : index
    %11 = vector.load %arg5[%c0_6, %c0_7] : memref<32x64xf32, #tpu.memory_space<vmem>>, vector<32x64xf32>
    tpu.vector_store %arg5[%c0_6, %c0_7], %10 {strides = array<i32>} : memref<32x64xf32, #tpu.memory_space<vmem>>, vector<32x64xf32>,
    %c0_i32_8 = arith.constant 0 : i32
    %12 = arith.cmpi eq, %arg1, %c0_i32_8 : i32
    %13 = arith.extui %12 : i1 to i32
    %c0_i32_9 = arith.constant 0 : i32
    %14 = arith.cmpi ne, %13, %c0_i32_9 : i32
    scf.if %14 {
      %c0_10 = arith.constant 0 : index
      %c0_11 = arith.constant 0 : index
      %15 = vector.load %arg5[%c0_10, %c0_11] : memref<32x64xf32, #tpu.memory_space<vmem>>, vector<32x64xf32>
      %cst_12 = arith.constant dense<0.000000e+00> : vector<64xf32>
      %16 = vector.multi_reduction <add>, %15, %cst_12 [0] : vector<32x64xf32> to vector<64xf32>
      %17 = vector.shape_cast %16 : vector<64xf32> to vector<1x64xf32>
      %18 = vector.shape_cast %17 : vector<1x64xf32> to vector<1x1x64xf32>
      %c0_13 = arith.constant 0 : index
      %c0_14 = arith.constant 0 : index
      %c0_15 = arith.constant 0 : index
      %19 = vector.load %arg4[%c0_13, %c0_14, %c0_15] : memref<1x1x64xf32, #tpu.memory_space<vmem>>, vector<1x1x64xf32>
      tpu.vector_store %arg4[%c0_13, %c0_14, %c0_15], %18 {strides = array<i32>} : memref<1x1x64xf32, #tpu.memory_space<vmem>>, vector<1x1x64xf32>,
    } else {
    }
    return
  }
  func.func @transform_0(%arg0: i32, %arg1: i32) -> (i32, i32) {
    %c1_i32 = arith.constant 1 : i32
    %0 = arith.muli %arg0, %c1_i32 : i32
    %1 = arith.addi %0, %arg1 : i32
    %c0_i32 = arith.constant 0 : i32
    %c0_i32_0 = arith.constant 0 : i32
    return %1, %c0_i32 : i32, i32
  }
  func.func @transform_1(%arg0: i32, %arg1: i32) -> (i32, i32) {
    %c1_i32 = arith.constant 1 : i32
    %0 = arith.muli %arg0, %c1_i32 : i32
    %1 = arith.addi %0, %arg1 : i32
    %c0_i32 = arith.constant 0 : i32
    %c0_i32_0 = arith.constant 0 : i32
    return %1, %c0_i32 : i32, i32
  }
  func.func @transform_2(%arg0: i32, %arg1: i32) -> (i32, i32, i32) {
    %c0_i32 = arith.constant 0 : i32
    %c0_i32_0 = arith.constant 0 : i32
    %c0_i32_1 = arith.constant 0 : i32
    return %arg0, %c0_i32, %c0_i32_0 : i32, i32, i32
  }
}

</mosaic_0001>

<llo_original>
// kernel: tpu_custom_call.1
$region0: #{tpu_custom_call.1}
  #allocation0 [shape = 'u32[]', space=smem, size = 0x4, offset = 0x4, fixed_abs, tag = 'smem constant byte address 0x4 - core index']
  #allocation1 [shape = 'u32[144,128]{1,0:T(1,128)}', space=vmem, size = 0x12000, scoped, tag = 'internal scratch']
  #allocation2 [shape = 'f32[32,64]{1,0:T(8,128)}', space=vmem, size = 0x4000, scoped, tag = 'scratch operand']
  %s0 = inlined_call_operand.hbm [shape: f32[32,64], index: 0, kind: input, shape index: {}]
  %s1 = inlined_call_operand.hbm [shape: f32[32,64], index: 1, kind: input, shape index: {}]
  %s2 = inlined_call_operand.hbm [shape: f32[1,1,64], index: 2, kind: output, shape index: {}]
  %s3 = sld [smem:[#allocation0]]
  $region34: #{tpu_custom_call.1} parent=0
    _
  %s5 = ssub.s32 1, %s3
  %s6 = scalar_select 0, %s5, %s3
  $region1: #{tpu_custom_call.1} parent=0
    #allocation3 [shape = 'u8[16384]{0}', space=vmem, size = 0x4000, scoped, tag = 'input window, operand 0, single buffered']
    #allocation4 [shape = 's32[1]{0}', space=sflag, size = 0x4, scoped, tag = 'scoped memory for tpu_custom_call.1']
    #allocation5 [shape = 's32[1]{0}', space=sflag, size = 0x4, scoped, tag = 'scoped memory for tpu_custom_call.1']
    #allocation6 [shape = 'u8[16384]{0}', space=vmem, size = 0x4000, scoped, tag = 'input window, operand 1, single buffered']
    #allocation7 [shape = 's32[1]{0}', space=sflag, size = 0x4, scoped, tag = 'scoped memory for tpu_custom_call.1']
    #allocation8 [shape = 'u8[512]{0}', space=vmem, size = 0x400, scoped, tag = 'output window, operand 0, single buffered']
    %7 = vsyncpa [#allocation4], 0
    %8 = vsyncpa [#allocation7], 0
    %9 = vsyncpa [#allocation5], 0
    // Predicated region
    $region2: #{tpu_custom_call.1} parent=1 // pred_check
      _
    $region3: #{tpu_custom_call.1} parent=1 // pred_check_branch
      %11 = sbr.rel (0) target = $region5
    $region4: #{tpu_custom_call.1} parent=1 // pred_region
      %s12 = sadd.s32 0, 0
      %s13 = smul.u32 4, %s12
      %s15 = ssub.s32 512, 512
      %16 = vsyncadd [#allocation4], %s15
      %s17 = smul.addr %s13, 128
      %s18 = scalar_lea.hbm %s0, %s17
      %s19 = sshll.u32 [#allocation3], 4
      %s20 = int_to_ptr.vmem [resolvable:$true] %s19
      %25 = dma.hbm_to_vmem [thread:$0]  %s18, 512, %s20, [#allocation4], 128, 128, 8
    $region5: #{tpu_custom_call.1} parent=1 // pred_fallthru
      _
    // Predicated region
    $region6: #{tpu_custom_call.1} parent=1 // pred_check
      _
    $region7: #{tpu_custom_call.1} parent=1 // pred_check_branch
      %27 = sbr.rel (0) target = $region9
    $region8: #{tpu_custom_call.1} parent=1 // pred_region
      %s28 = sadd.s32 0, 0
      %s29 = smul.u32 4, %s28
      %s31 = ssub.s32 512, 512
      %32 = vsyncadd [#allocation7], %s31
      %s33 = smul.addr %s29, 128
      %s34 = scalar_lea.hbm %s1, %s33
      %s35 = sshll.u32 [#allocation6], 4
      %s36 = int_to_ptr.vmem [resolvable:$true] %s35
      %41 = dma.hbm_to_vmem [thread:$0]  %s34, 512, %s36, [#allocation7], 128, 128, 8
    $region9: #{tpu_custom_call.1} parent=1 // pred_fallthru
      _
    // Predicated region
    $region10: #{tpu_custom_call.1} parent=1 // pred_check
      _
    $region11: #{tpu_custom_call.1} parent=1 // pred_check_branch
      %43 = sbr.rel (0) target = $region13
    $region12: #{tpu_custom_call.1} parent=1 // pred_region
      %44 = dma.done [#allocation4], 512
    $region13: #{tpu_custom_call.1} parent=1 // pred_fallthru
      _
    // Predicated region
    $region14: #{tpu_custom_call.1} parent=1 // pred_check
      _
    $region15: #{tpu_custom_call.1} parent=1 // pred_check_branch
      %46 = sbr.rel (0) target = $region17
    $region16: #{tpu_custom_call.1} parent=1 // pred_region
      %47 = dma.done [#allocation7], 512
    $region17: #{tpu_custom_call.1} parent=1 // pred_fallthru
      _
    %s48 = sadd.s32 0, 0
    %s49 = smul.u32 4, %s48
    %s50 = sadd.s32 0, 0
    %s51 = smul.u32 4, %s50
    %p52 = scmp.eq.s32.totalorder 0, 0
    // Predicated region
    $region18: #{tpu_custom_call.1} parent=1 // pred_check
      %p53 = pneg %p52
    $region19: #{tpu_custom_call.1} parent=1 // pred_check_branch
      %55 = sbr.rel (%p53) target = $region21
    $region20: #{tpu_custom_call.1} parent=1 // pred_region
      %vm56 = vcmask 523264
      %57 = vst.msk [vmem:[#allocation2] sm:$0xff] %vm56, 0.0
      %58 = vst.msk [vmem:[#allocation2 + $0x8] sm:$0xff] %vm56, 0.0
      %59 = vst.msk [vmem:[#allocation2 + $0x10] sm:$0xff] %vm56, 0.0
      %60 = vst.msk [vmem:[#allocation2 + $0x18] sm:$0xff] %vm56, 0.0
    $region21: #{tpu_custom_call.1} parent=1 // pred_fallthru
      _
    %v61 = vld [vmem:[#allocation3] sm:$0xff]
    %v62 = vld [vmem:[#allocation3 + $0x8] sm:$0xff]
    %v63 = vld [vmem:[#allocation3 + $0x10] sm:$0xff]
    %v64 = vld [vmem:[#allocation3 + $0x18] sm:$0xff]
    %v65 = vld [vmem:[#allocation6] sm:$0xff]
    %v66 = vld [vmem:[#allocation6 + $0x8] sm:$0xff]
    %v67 = vld [vmem:[#allocation6 + $0x10] sm:$0xff]
    %v68 = vld [vmem:[#allocation6 + $0x18] sm:$0xff]
    %v69 = vld [vmem:[#allocation2] sm:$0xff]
    %v70 = vld [vmem:[#allocation2 + $0x8] sm:$0xff]
    %v71 = vld [vmem:[#allocation2 + $0x10] sm:$0xff]
    %v72 = vld [vmem:[#allocation2 + $0x18] sm:$0xff]
    %v73 = vadd.f32 %v65, 3.97545e-31
    %v74 = vadd.f32 %v66, 3.97545e-31
    %v75 = vadd.f32 %v67, 3.97545e-31
    %v76 = vadd.f32 %v68, 3.97545e-31
    %v77 = vlog2.pop %v73
    %v78 = vmul.f32 %v77, 0.6931472
    %v79 = vlog2.pop %v74
    %v80 = vmul.f32 %v79, 0.6931472
    %v81 = vlog2.pop %v75
    %v82 = vmul.f32 %v81, 0.6931472
    %v83 = vlog2.pop %v76
    %v84 = vmul.f32 %v83, 0.6931472
    %v85 = vmul.f32 %v61, %v78
    %v86 = vmul.f32 %v62, %v80
    %v87 = vmul.f32 %v63, %v82
    %v88 = vmul.f32 %v64, %v84
    %v89 = vadd.f32 %v69, %v85
    %v90 = vadd.f32 %v70, %v86
    %v91 = vadd.f32 %v71, %v87
    %v92 = vadd.f32 %v72, %v88
    %vm93 = vcmask 523264
    %94 = vst.msk [vmem:[#allocation2] sm:$0xff] %vm93, %v89
    %95 = vst.msk [vmem:[#allocation2 + $0x8] sm:$0xff] %vm93, %v90
    %96 = vst.msk [vmem:[#allocation2 + $0x10] sm:$0xff] %vm93, %v91
    %97 = vst.msk [vmem:[#allocation2 + $0x18] sm:$0xff] %vm93, %v92
    // Predicated region
    $region22: #{tpu_custom_call.1} parent=1 // pred_check
      %p98 = pneg %p52
    $region23: #{tpu_custom_call.1} parent=1 // pred_check_branch
      %100 = sbr.rel (%p98) target = $region25
    $region24: #{tpu_custom_call.1} parent=1 // pred_region
      %v101 = vld [vmem:[#allocation2] sm:$0xff]
      %v102 = vld [vmem:[#allocation2 + $0x8] sm:$0xff]
      %v103 = vld [vmem:[#allocation2 + $0x10] sm:$0xff]
      %v104 = vld [vmem:[#allocation2 + $0x18] sm:$0xff]
      %v105 = vsel %vm93, %v101, 0.0
      %v106 = vsel %vm93, %v102, 0.0
      %v107 = vadd.f32 %v105, %v106
      %v108 = vsel %vm93, %v103, 0.0
      %v109 = vadd.f32 %v107, %v108
      %v110 = vsel %vm93, %v104, 0.0
      %v111 = vadd.f32 %v109, %v110
      %v112 = vrot.slane %v111, 4
      %v113 = vadd.f32 %v111, %v112
      %v114 = vrot.slane %v113, 2
      %v115 = vadd.f32 %v113, %v114
      %v116 = vrot.slane %v115, 1
      %v117 = vadd.f32 %v115, %v116
      %vm118 = vcmask 516096
      %119 = vst.msk [vmem:[#allocation8] sm:$0x1] %vm118, %v117
    $region25: #{tpu_custom_call.1} parent=1 // pred_fallthru
      _
    // Predicated region
    $region26: #{tpu_custom_call.1} parent=1 // pred_check
      _
    $region27: #{tpu_custom_call.1} parent=1 // pred_check_branch
      %121 = sbr.rel (0) target = $region29
    $region28: #{tpu_custom_call.1} parent=1 // pred_region
      %s123 = ssub.s32 16, 16
      %124 = vsyncadd [#allocation5], %s123
      %s126 = sshll.u32 [#allocation8], 4
      %s127 = int_to_ptr.vmem [resolvable:$true] %s126
      %129 = dma.vmem_to_hbm [thread:$0]  %s127, 16, %s2, [#allocation5]
    $region29: #{tpu_custom_call.1} parent=1 // pred_fallthru
      _
    // Predicated region
    $region30: #{tpu_custom_call.1} parent=1 // pred_check
      _
    $region31: #{tpu_custom_call.1} parent=1 // pred_check_branch
      %131 = sbr.rel (0) target = $region33
    $region32: #{tpu_custom_call.1} parent=1 // pred_region
      %132 = dma.done [#allocation5], 16
    $region33: #{tpu_custom_call.1} parent=1 // pred_fallthru
      _
    %133 = vsyncpa [#allocation4], 1
    %134 = vsyncpa [#allocation7], 1
    %135 = vsyncpa [#allocation5], 1

</llo_original>
